<compile_context>
chip_gen: v7x
topology: tpu7x:2x2x1
jax: 0.10.0
libtpu: 0.0.40
codegen_flags: <defaults>
</compile_context>

<pallas_src>
import jax
import jax.numpy as jnp
from jax.experimental import pallas as pl
from jax.experimental.pallas import tpu as pltpu


def _h_sigmoid_kernel(x_ref, o_ref):
    # ReLU6(x + 3) / 6  ==  clamp(x + 3, 0, 6) * (1/6), computed in f32.
    x = x_ref[...].astype(jnp.float32)
    y = jnp.clip(x + 3.0, 0.0, 6.0) * (1.0 / 6.0)
    o_ref[...] = y.astype(o_ref.dtype)


def _h_sigmoid_xla(x):
    # Fallback / fusion path (small tensors, sizes with no 128-multiple
    # divisor, non-float dtypes). PyTorch's `/ 6` promotes ints to float.
    out_dtype = x.dtype if jnp.issubdtype(x.dtype, jnp.floating) else jnp.float32
    y = jnp.clip(x.astype(jnp.float32) + 3.0, 0.0, 6.0) * (1.0 / 6.0)
    return y.astype(out_dtype)


def _round_up(n: int, m: int) -> int:
    return ((n + m - 1) // m) * m


def _tpu_tiling_config():
    """Returns (target_block_bytes, min_grid_steps) for the local TPU gen."""
    try:
        kind = jax.devices()[0].device_kind.lower()
    except Exception:
        kind = ""
    if "v7" in kind or "7x" in kind:
        # v7x: 2 TensorCores, ~3.2 TB/s HBM -> bigger blocks, >=2 steps/core.
        # 4 MiB x (in+out) x 2 buffers = 16 MiB, inside 32 MiB scoped VMEM.
        return 4 * 1024 * 1024, 4
    if "v6" in kind:
        # v6e: 1 TC, 32 MiB scoped VMEM default -> 4 MiB blocks, no split.
        return 4 * 1024 * 1024, 1
    if "v5" in kind:
        # v5e: 16 MiB scoped VMEM default -> keep 2 MiB blocks (8 MiB resident).
        return 2 * 1024 * 1024, 1
    # Unknown chip: conservative.
    return 2 * 1024 * 1024, 1


_SMALL_SIZE_THRESHOLD = 256 * 1024  # elements; below this, XLA fuses it better.


def h_sigmoid(x: jax.Array, *,
              small_size_threshold: int = _SMALL_SIZE_THRESHOLD,
              block_bytes: int | None = None) -> jax.Array:
    """h_sigmoid forward: ReLU6(x + 3) / 6. Works for any rank/shape."""
    dtype = x.dtype
    total = x.size

    # Integer dtypes: PyTorch semantics (true division -> float); keep on XLA.
    if not jnp.issubdtype(dtype, jnp.floating):
        return _h_sigmoid_xla(x)

    # Lane-dense column width: largest multiple of 128 (<= 2048) that divides
    # the element count exactly -> pure reshape, zero padding, zero slicing.
    cols = 0
    for c in range(2048, 127, -128):
        if total % c == 0:
            cols = c
            break

    # Small or awkward sizes: plain jnp (XLA fuses into the producer; a
    # standalone HBM-bound kernel plus pad/slice passes would only add traffic).
    if cols == 0 or total < small_size_threshold:
        return _h_sigmoid_xla(x)

    itemsize = jnp.dtype(dtype).itemsize
    # Packed sublane granularity: 8 for 32-bit, 16 for bf16, 32 for int8/fp8.
    sub = max(8, 32 // itemsize)

    target_block_bytes, min_steps = _tpu_tiling_config()
    if block_bytes is not None:
        target_block_bytes = block_bytes

    rows = total // cols

    # Row tile of ~target_block_bytes, a multiple of `sub` so stores stay
    # unmasked; if it exceeds the array, use the full extent (always legal).
    tr = max(sub, (target_block_bytes // (cols * itemsize)) // sub * sub)
    tr = min(tr, rows)

    # v7x only: target >= 2 grid steps per TensorCore so both cores stream and
    # keep intra-core double-buffering. Single-TC chips skip the split.
    if min_steps > 1 and pl.cdiv(rows, tr) < min_steps and rows >= min_steps * sub:
        tr = _round_up(pl.cdiv(rows, min_steps), sub)

    x2d = x.reshape(rows, cols)
    grid = (pl.cdiv(rows, tr),)  # ragged trailing block is masked by Pallas

    out2d = pl.pallas_call(
        _h_sigmoid_kernel,
        out_shape=jax.ShapeDtypeStruct((rows, cols), dtype),
        grid_spec=pltpu.PrefetchScalarGridSpec(
            num_scalar_prefetch=0,
            grid=grid,
            in_specs=[pl.BlockSpec((tr, cols), lambda i: (i, 0))],
            out_specs=pl.BlockSpec((tr, cols), lambda i: (i, 0)),
        ),
        compiler_params=pltpu.CompilerParams(
            dimension_semantics=("parallel",)),
        input_output_aliases={0: 0},
    )(x2d)

    return out2d.reshape(x.shape)


if __name__ == "__main__":

    def ref_fn(v):
        return (jnp.clip(v.astype(jnp.float32) + 3.0, 0.0, 6.0) / 6.0).astype(v.dtype)

    # 1) Small NCHW activation (typical TCINet conv output) -> XLA fast path.
    x = jax.random.normal(jax.random.PRNGKey(0), (2, 4, 16, 16), dtype=jnp.float32) * 4.0
    ref = ref_fn(x)
    y = jax.block_until_ready(h_sigmoid(x))
    assert y.shape == x.shape and y.dtype == x.dtype
    assert jnp.allclose(y, ref, atol=1e-6), "mismatch (fast path)"

    # 2) Same tensor forced through the Pallas path (threshold override).
    y_p = jax.block_until_ready(h_sigmoid(x, small_size_threshold=0))
    assert jnp.allclose(y_p, ref, atol=1e-6), "mismatch (pallas path)"

    # 3) Multi-step grid with a ragged trailing block (rows=36, tr=8 -> 5 steps).
    x3 = jax.random.normal(jax.random.PRNGKey(1), (2, 8, 36, 128), dtype=jnp.float32) * 4.0
    ref3 = ref_fn(x3)
    y3 = jax.block_until_ready(
        h_sigmoid(x3, small_size_threshold=0, block_bytes=64 * 1024))
    assert y3.shape == x3.shape and jnp.allclose(y3, ref3, atol=1e-6), \
        "mismatch (ragged multi-step path)"

    # 4) Shape with no 128-multiple divisor -> XLA fallback (never padded).
    x4 = jax.random.normal(jax.random.PRNGKey(2), (3, 5, 7, 11), dtype=jnp.float32) * 4.0
    y4 = jax.block_until_ready(h_sigmoid(x4))
    assert y4.shape == x4.shape and jnp.allclose(y4, ref_fn(x4), atol=1e-6), \
        "mismatch (fallback path)"

    # 5) bf16 through the Pallas path (internal math in f32).
    x5 = (jax.random.normal(jax.random.PRNGKey(3), (2, 16, 32, 32)) * 4.0
          ).astype(jnp.bfloat16)
    ref5 = ref_fn(x5)
    y5 = jax.block_until_ready(h_sigmoid(x5, small_size_threshold=0))
    assert y5.dtype == jnp.bfloat16 and jnp.allclose(
        y5.astype(jnp.float32), ref5.astype(jnp.float32), atol=1e-2), \
        "mismatch (bf16 path)"

    print("KERNEL_OK")
</pallas_src>

<mosaic_0001>
module attributes {stable_mosaic.version = 11 : i64} {
  func.func @_h_sigmoid_kernel(%arg0: i32, %arg1: memref<1x2048xf32, #tpu.memory_space<vmem>>, %arg2: memref<1x2048xf32, #tpu.memory_space<vmem>>) attributes {dimension_semantics = [#tpu.dimension_semantics<parallel>], iteration_bounds = array<i64: 1>, scalar_prefetch = 0 : i64, scratch_operands = 0 : i64, tpu.core_type = #tpu.core_type<tc>, window_params = [{transform_indices = @transform_0, window_bounds = array<i64: 1, 2048>}, {transform_indices = @transform_1, window_bounds = array<i64: 1, 2048>}]} {
    %c0 = arith.constant 0 : index
    %c0_0 = arith.constant 0 : index
    %0 = vector.load %arg1[%c0, %c0_0] : memref<1x2048xf32, #tpu.memory_space<vmem>>, vector<1x2048xf32>
    %cst = arith.constant 3.000000e+00 : f32
    %1 = vector.broadcast %cst : f32 to vector<1x2048xf32>
    %2 = arith.addf %0, %1 : vector<1x2048xf32>
    %cst_1 = arith.constant 0.000000e+00 : f32
    %cst_2 = arith.constant 6.000000e+00 : f32
    %3 = vector.broadcast %cst_1 : f32 to vector<1x2048xf32>
    %4 = arith.maximumf %3, %2 : vector<1x2048xf32>
    %5 = vector.broadcast %cst_2 : f32 to vector<1x2048xf32>
    %6 = arith.minimumf %5, %4 : vector<1x2048xf32>
    %cst_3 = arith.constant 0.166666672 : f32
    %7 = vector.broadcast %cst_3 : f32 to vector<1x2048xf32>
    %8 = arith.mulf %6, %7 : vector<1x2048xf32>
    %c0_4 = arith.constant 0 : index
    %c0_5 = arith.constant 0 : index
    %9 = vector.load %arg2[%c0_4, %c0_5] : memref<1x2048xf32, #tpu.memory_space<vmem>>, vector<1x2048xf32>
    tpu.vector_store %arg2[%c0_4, %c0_5], %8 {strides = array<i32>} : memref<1x2048xf32, #tpu.memory_space<vmem>>, vector<1x2048xf32>,
    return
  }
  func.func @transform_0(%arg0: i32) -> (i32, i32) {
    %c0_i32 = arith.constant 0 : i32
    %c0_i32_0 = arith.constant 0 : i32
    return %arg0, %c0_i32 : i32, i32
  }
  func.func @transform_1(%arg0: i32) -> (i32, i32) {
    %c0_i32 = arith.constant 0 : i32
    %c0_i32_0 = arith.constant 0 : i32
    return %arg0, %c0_i32 : i32, i32
  }
}

</mosaic_0001>

<llo_original>
// kernel: tpu_custom_call.1
$region0: #{tpu_custom_call.1}
  #allocation0 [shape = 'u32[]', space=smem, size = 0x4, offset = 0x4, fixed_abs, tag = 'smem constant byte address 0x4 - core index']
  #allocation1 [shape = 'u32[144,128]{1,0:T(1,128)}', space=vmem, size = 0x12000, scoped, tag = 'internal scratch']
  %s0 = inlined_call_operand.hbm [shape: f32[1,2048], index: 0, kind: input, shape index: {}, may-alias: {0,1}]
  %s1 = inlined_call_operand.hbm [shape: f32[1,2048], index: 1, kind: output, shape index: {}, may-alias: {0,1}]
  %s2 = sld [smem:[#allocation0]]
  $region18: #{tpu_custom_call.1} parent=0
    _
  %s4 = ssub.s32 1, %s2
  %s5 = scalar_select 0, %s4, %s2
  $region1: #{tpu_custom_call.1} parent=0
    #allocation2 [shape = 'u8[8192]{0}', space=vmem, size = 0x2000, scoped, tag = 'input window, operand 0, single buffered']
    #allocation3 [shape = 's32[1]{0}', space=sflag, size = 0x4, scoped, tag = 'scoped memory for tpu_custom_call.1']
    #allocation4 [shape = 's32[1]{0}', space=sflag, size = 0x4, scoped, tag = 'scoped memory for tpu_custom_call.1']
    #allocation5 [shape = 'u8[8192]{0}', space=vmem, size = 0x2000, scoped, tag = 'output window, operand 0, single buffered']
    %6 = vsyncpa [#allocation3], 0
    %7 = vsyncpa [#allocation4], 0
    // Predicated region
    $region2: #{tpu_custom_call.1} parent=1 // pred_check
      _
    $region3: #{tpu_custom_call.1} parent=1 // pred_check_branch
      %9 = sbr.rel (0) target = $region5
    $region4: #{tpu_custom_call.1} parent=1 // pred_region
      %s11 = ssub.s32 256, 256
      %12 = vsyncadd [#allocation3], %s11
      %s14 = sshll.u32 [#allocation2], 4
      %s15 = int_to_ptr.vmem [resolvable:$true] %s14
      %17 = dma.hbm_to_vmem [thread:$0]  %s0, 256, %s15, [#allocation3]
    $region5: #{tpu_custom_call.1} parent=1 // pred_fallthru
      _
    // Predicated region
    $region6: #{tpu_custom_call.1} parent=1 // pred_check
      _
    $region7: #{tpu_custom_call.1} parent=1 // pred_check_branch
      %19 = sbr.rel (0) target = $region9
    $region8: #{tpu_custom_call.1} parent=1 // pred_region
      %20 = dma.done [#allocation3], 256
    $region9: #{tpu_custom_call.1} parent=1 // pred_fallthru
      _
    %v21 = vld [vmem:[#allocation2] sm:$0xff]
    %v22 = vld [vmem:[#allocation2 + $0x8] sm:$0xff]
    %v23 = vadd.f32 %v21, 3.0
    %v24 = vadd.f32 %v22, 3.0
    %v25 = vmax.f32 %v23, 0.0
    %v26 = vmax.f32 %v24, 0.0
    %v27 = vmin.f32 %v25, 6.0
    %v28 = vmin.f32 %v26, 6.0
    %v29 = vmul.f32 %v27, 0.16666667
    %v30 = vmul.f32 %v28, 0.16666667
    %31 = vst [vmem:[#allocation5] sm:$0xff] %v29
    %32 = vst [vmem:[#allocation5 + $0x8] sm:$0xff] %v30
    // Predicated region
    $region10: #{tpu_custom_call.1} parent=1 // pred_check
      _
    $region11: #{tpu_custom_call.1} parent=1 // pred_check_branch
      %34 = sbr.rel (0) target = $region13
    $region12: #{tpu_custom_call.1} parent=1 // pred_region
      %s36 = ssub.s32 256, 256
      %37 = vsyncadd [#allocation4], %s36
      %s39 = sshll.u32 [#allocation5], 4
      %s40 = int_to_ptr.vmem [resolvable:$true] %s39
      %42 = dma.vmem_to_hbm [thread:$0]  %s40, 256, %s1, [#allocation4]
    $region13: #{tpu_custom_call.1} parent=1 // pred_fallthru
      _
    // Predicated region
    $region14: #{tpu_custom_call.1} parent=1 // pred_check
      _
    $region15: #{tpu_custom_call.1} parent=1 // pred_check_branch
      %44 = sbr.rel (0) target = $region17
    $region16: #{tpu_custom_call.1} parent=1 // pred_region
      %45 = dma.done [#allocation4], 256
    $region17: #{tpu_custom_call.1} parent=1 // pred_fallthru
      _
    %46 = vsyncpa [#allocation3], 1
    %47 = vsyncpa [#allocation4], 1

</llo_original>
